<compile_context>
chip_gen: v5e
topology: v5e:2x2
jax: 0.10.0
libtpu: 0.0.40
codegen_flags: <defaults>
</compile_context>

<pallas_src>
import jax
import jax.numpy as jnp
from jax import lax
from jax.experimental import pallas as pl
from jax.experimental.pallas import tpu as pltpu

# Above this row count the one-hot matmul wastes too many MACs (MXU-vs-HBM
# break-even is roughly 150-300 rows; v5e would prefer an even lower cutoff).
ONEHOT_MAX_ROWS = 256


def _round_up(x, m):
    return ((x + m - 1) // m) * m


def _vmem_budget_bytes():
    """Per-TensorCore VMEM budget with headroom for compiler scratch."""
    try:
        cap = int(pltpu.get_tpu_info().vmem_capacity_bytes)
    except Exception:  # be conservative if the query is unavailable
        cap = 64 << 20
    # v7x: 64 MiB/TC -> leave 12 MiB headroom; v5e/v6e: 128 MiB -> leave 24 MiB.
    headroom = (12 << 20) if cap <= (64 << 20) else (24 << 20)
    return max(cap - headroom, 16 << 20)


# ----------------------------------------------------------------------------
# Path 1: one-hot MXU matmul (small tables).
# ----------------------------------------------------------------------------
def _onehot_gather_kernel(idx_ref, emb_ref, out_ref):
    """idx_ref: VMEM i32[(BN,1)], emb_ref: VMEM table (whole array resident),
    out_ref: VMEM (BN, c_pad)."""
    idx = idx_ref[...]                                       # (BN, 1) int32
    rows = emb_ref.shape[0]
    bn = out_ref.shape[0]
    row_ids = lax.broadcasted_iota(jnp.int32, (bn, rows), 1)
    onehot = (row_ids == idx).astype(emb_ref.dtype)          # table dtype -> full-rate MXU
    out_ref[...] = jnp.dot(
        onehot, emb_ref[...], preferred_element_type=jnp.float32
    ).astype(out_ref.dtype)


# ----------------------------------------------------------------------------
# Path 2: exact dynamic gather from a VMEM-resident table (larger tables).
# ----------------------------------------------------------------------------
def _loop_gather_kernel(idx_ref, emb_ref, out_ref):
    """idx_ref: SMEM i32[(n_pad,)] (scalar-prefetched flat indices),
    emb_ref: VMEM table (whole array resident), out_ref: VMEM (BN, c_pad)."""
    bn = out_ref.shape[0]
    rows = emb_ref.shape[0]
    base = pl.program_id(0) * bn

    def body(i, carry):
        r = idx_ref[base + i]
        r = jnp.clip(r, 0, rows - 1)          # memory-safe for bad indices
        out_ref[pl.ds(i, 1), :] = emb_ref[pl.ds(r, 1), :]
        return carry

    lax.fori_loop(0, bn, body, 0, unroll=8)


# ----------------------------------------------------------------------------
# Wrapper.
# ----------------------------------------------------------------------------
def sparse_embedding_forward(embedding, indices=None):
    """JAX/Pallas equivalent of SparseEmbedding.forward."""
    num_rows, num_cols = embedding.shape
    if num_rows == 0:
        return None
    if indices is None:
        # PyTorch returns the raw parameter; no compute needed.
        return embedding

    indices = jnp.asarray(indices, jnp.int32)
    out_batch_shape = indices.shape
    flat_idx = indices.reshape(-1)
    n = int(flat_idx.shape[0])
    if n == 0:
        return jnp.zeros(out_batch_shape + (num_cols,), embedding.dtype)

    # Python-style negative-index wrap (matches torch tensor indexing).
    flat_idx = jnp.where(flat_idx < 0, flat_idx + num_rows, flat_idx)

    itemsize = jnp.dtype(embedding.dtype).itemsize
    c_pad = _round_up(num_cols, 128)          # lane-dense output blocks

    # Adaptive block height: don't pad tiny batches to 256; use 512 for big n.
    n8 = _round_up(n, 8)
    bn = 512 if n8 >= 1024 else min(256, n8)
    while bn > 64 and 2 * bn * c_pad * itemsize > (8 << 20):
        bn //= 2                               # keep the out double-buffer modest
    n_pad = _round_up(n, bn)

    budget = _vmem_budget_bytes()
    out_blk = bn * c_pad * itemsize
    idx_blk = bn * 4

    # Path selection + honest VMEM accounting (per-TC; with "parallel" the
    # table is duplicated in each TC's VMEM, so the budget must be per-TC).
    use_onehot = num_rows <= ONEHOT_MAX_ROWS
    rows_pad = _round_up(num_rows, 128) if use_onehot else num_rows
    table_bytes = rows_pad * c_pad * itemsize
    if use_onehot:
        onehot_interm = bn * rows_pad * (itemsize + 4)   # one-hot + int32 iota
        vmem_need = table_bytes + 2 * (out_blk + idx_blk) + onehot_interm + (2 << 20)
        if vmem_need > budget:
            use_onehot = False                 # retry with the leaner gather path
            rows_pad = num_rows
            table_bytes = rows_pad * c_pad * itemsize
    if not use_onehot:
        vmem_need = table_bytes + 2 * out_blk + n_pad * 4 + (2 << 20)

    if vmem_need > budget:
        # TODO(synk): streaming DMA-gather kernel for tables > per-TC VMEM
        # (pl.ANY table + scalar-prefetched indices + make_async_copy ring).
        out = jnp.take(embedding, flat_idx, axis=0)
        return out.reshape(out_batch_shape + (num_cols,))

    # Wrapper-side padding (rows only for the matmul path, cols for lane density).
    emb = embedding
    if c_pad != num_cols or rows_pad != num_rows:
        emb = jnp.pad(embedding, ((0, rows_pad - num_rows), (0, c_pad - num_cols)))
    if n_pad != n:
        flat_idx = jnp.pad(flat_idx, (0, n_pad - n))   # pads gather row 0; sliced off

    vmem_limit = int(min(max(vmem_need, 16 << 20), budget))
    out_bytes = n_pad * c_pad * itemsize
    grid = (n_pad // bn,)

    if use_onehot:
        cost = pl.CostEstimate(
            flops=2 * n_pad * rows_pad * c_pad,
            transcendentals=0,
            bytes_accessed=table_bytes + n_pad * 4 + out_bytes)
        idx2d = flat_idx.reshape(n_pad, 1)
        out = pl.pallas_call(
            _onehot_gather_kernel,
            out_shape=jax.ShapeDtypeStruct((n_pad, c_pad), embedding.dtype),
            grid=grid,
            in_specs=[
                pl.BlockSpec((bn, 1), lambda i: (i, 0)),
                pl.BlockSpec(memory_space=pltpu.MemorySpace.VMEM),  # table resident
            ],
            out_specs=pl.BlockSpec((bn, c_pad), lambda i: (i, 0)),
            compiler_params=pltpu.CompilerParams(
                dimension_semantics=("parallel",),
                vmem_limit_bytes=vmem_limit),
            cost_estimate=cost,
        )(idx2d, emb)
    else:
        cost = pl.CostEstimate(
            flops=0,                       # memory-bound gather, no MXU work
            transcendentals=0,
            bytes_accessed=table_bytes + n_pad * 4 + out_bytes)
        out = pl.pallas_call(
            _loop_gather_kernel,
            out_shape=jax.ShapeDtypeStruct((n_pad, c_pad), embedding.dtype),
            grid_spec=pltpu.PrefetchScalarGridSpec(
                num_scalar_prefetch=1,     # flat indices -> SMEM
                grid=grid,
                in_specs=[pl.BlockSpec(memory_space=pltpu.MemorySpace.VMEM)],
                out_specs=pl.BlockSpec((bn, c_pad), lambda i, idx: (i, 0)),
            ),
            compiler_params=pltpu.CompilerParams(
                dimension_semantics=("parallel",),
                vmem_limit_bytes=vmem_limit),
            cost_estimate=cost,
        )(flat_idx, emb)

    out = out[:n, :num_cols]
    return out.reshape(out_batch_shape + (num_cols,))


if __name__ == "__main__":
    key = jax.random.PRNGKey(0)
    k_emb, k_idx, k_emb2, k_idx2 = jax.random.split(key, 4)

    # ---- Case 1: small table -> one-hot MXU path ----------------------------
    num_rows, num_cols = 64, 128
    lb, ub = -0.05, 0.05                      # init_params(lb, ub)
    embedding = jax.random.uniform(
        k_emb, (num_rows, num_cols), dtype=jnp.float32, minval=lb, maxval=ub)
    indices = jax.random.randint(k_idx, (16,), 0, num_rows, dtype=jnp.int32)

    out = jax.block_until_ready(sparse_embedding_forward(embedding, indices))
    expected = embedding[indices]
    assert out.shape == (16, num_cols) and out.dtype == embedding.dtype
    assert jnp.allclose(out, expected), "one-hot gather mismatch vs reference"

    # 2-D index batch through the same path (shape handling).
    idx2d = indices[:10].reshape(2, 5)
    out2d = jax.block_until_ready(sparse_embedding_forward(embedding, idx2d))
    assert out2d.shape == (2, 5, num_cols)
    assert jnp.allclose(out2d, embedding[idx2d])

    # ---- Case 2: larger table, num_cols not a multiple of 128 -> gather path
    num_rows2, num_cols2 = 1024, 96
    embedding2 = jax.random.uniform(
        k_emb2, (num_rows2, num_cols2), dtype=jnp.float32, minval=lb, maxval=ub)
    indices2 = jax.random.randint(k_idx2, (40,), 0, num_rows2, dtype=jnp.int32)

    out_g = jax.block_until_ready(sparse_embedding_forward(embedding2, indices2))
    expected_g = embedding2[indices2]
    assert out_g.shape == (40, num_cols2) and out_g.dtype == embedding2.dtype
    # Gather path is exact by construction -> bitwise comparison.
    assert jnp.array_equal(out_g, expected_g), "dynamic gather mismatch vs reference"

    # ---- Case 3: indices=None -> full table ---------------------------------
    full = jax.block_until_ready(sparse_embedding_forward(embedding, None))
    assert full.shape == (num_rows, num_cols)

    # ---- Case 4: num_rows == 0 -> None --------------------------------------
    empty = sparse_embedding_forward(jnp.zeros((0, num_cols), jnp.float32), indices)
    assert empty is None

    print("KERNEL_OK")
</pallas_src>

<mosaic_0001>
module attributes {stable_mosaic.version = 11 : i64} {
  func.func @_onehot_gather_kernel(%arg0: i32, %arg1: memref<16x1xi32, #tpu.memory_space<vmem>>, %arg2: memref<128x128xf32, #tpu.memory_space<vmem>>, %arg3: memref<16x128xf32, #tpu.memory_space<vmem>>) attributes {dimension_semantics = [#tpu.dimension_semantics<parallel>], iteration_bounds = array<i64: 1>, scalar_prefetch = 0 : i64, scratch_operands = 0 : i64, tpu.core_type = #tpu.core_type<tc>, window_params = [{transform_indices = @transform_0, window_bounds = array<i64: 16, 1>}, {pipeline_mode = #tpu.pipeline_mode<synchronous>, transform_indices = @transform_1, window_bounds = array<i64: 128, 128>}, {transform_indices = @transform_2, window_bounds = array<i64: 16, 128>}]} {
    %c0 = arith.constant 0 : index
    %c0_0 = arith.constant 0 : index
    %0 = vector.load %arg1[%c0, %c0_0] : memref<16x1xi32, #tpu.memory_space<vmem>>, vector<16x1xi32>
    %1 = tpu.iota {dimensions = array<i32: 1>} : vector<16x128xi32>
    %2 = vector.broadcast %0 : vector<16x1xi32> to vector<16x128xi32>
    %3 = arith.cmpi eq, %1, %2 : vector<16x128xi32>
    %4 = arith.extui %3 : vector<16x128xi1> to vector<16x128xi32>
    %5 = arith.sitofp %4 : vector<16x128xi32> to vector<16x128xf32>
    %c0_1 = arith.constant 0 : index
    %c0_2 = arith.constant 0 : index
    %6 = vector.load %arg2[%c0_1, %c0_2] : memref<128x128xf32, #tpu.memory_space<vmem>>, vector<128x128xf32>
    %cst = arith.constant dense<0.000000e+00> : vector<16x128xf32>
    %7 = tpu.matmul %5, %6, %cst {dimension_numbers = #tpu.dot_dimension_numbers<[1], [0], [0], [1], [0, 0, 1, 1], [], []>} : vector<16x128xf32>, vector<128x128xf32>, vector<16x128xf32> -> vector<16x128xf32>
    %c0_3 = arith.constant 0 : index
    %c0_4 = arith.constant 0 : index
    %8 = vector.load %arg3[%c0_3, %c0_4] : memref<16x128xf32, #tpu.memory_space<vmem>>, vector<16x128xf32>
    tpu.vector_store %arg3[%c0_3, %c0_4], %7 {strides = array<i32>} : memref<16x128xf32, #tpu.memory_space<vmem>>, vector<16x128xf32>,
    return
  }
  func.func @transform_0(%arg0: i32) -> (i32, i32) {
    %c0_i32 = arith.constant 0 : i32
    %c0_i32_0 = arith.constant 0 : i32
    return %arg0, %c0_i32 : i32, i32
  }
  func.func @transform_1(%arg0: i32) -> (i32, i32) {
    %c0_i32 = arith.constant 0 : i32
    %c0_i32_0 = arith.constant 0 : i32
    %c0_i32_1 = arith.constant 0 : i32
    return %c0_i32, %c0_i32_0 : i32, i32
  }
  func.func @transform_2(%arg0: i32) -> (i32, i32) {
    %c0_i32 = arith.constant 0 : i32
    %c0_i32_0 = arith.constant 0 : i32
    return %arg0, %c0_i32 : i32, i32
  }
}

</mosaic_0001>

<llo_original>
// kernel: tpu_custom_call.1
$region0: #{tpu_custom_call.1}
  #allocation0 [shape = 'u32[]', space=smem, size = 0x4, offset = 0x4, fixed_abs, tag = 'smem constant byte address 0x4 - core index']
  #allocation1 [shape = 'u32[72,128]{1,0:T(1,128)}', space=vmem, size = 0x9000, scoped, tag = 'internal scratch']
  %s0 = inlined_call_operand.vmem [shape: s32[16,1], index: 0, kind: input, shape index: {}]
  %s1 = inlined_call_operand.hbm [shape: f32[128,128], index: 1, kind: input, shape index: {}]
  %s2 = inlined_call_operand.hbm [shape: f32[16,128], index: 2, kind: output, shape index: {}]
  %s3 = sld [smem:[#allocation0]]
  $region22: #{tpu_custom_call.1} parent=0
    _
  %s5 = ssub.s32 1, %s3
  %s6 = scalar_select 0, %s5, %s3
  $region1: #{tpu_custom_call.1} parent=0
    #allocation2 [shape = 'u8[65536]{0}', space=vmem, size = 0x10000, scoped, tag = 'input window, operand 1, single buffered']
    #allocation3 [shape = 's32[1]{0}', space=sflag, size = 0x4, scoped, tag = 'scoped memory for tpu_custom_call.1']
    #allocation4 [shape = 's32[1]{0}', space=sflag, size = 0x4, scoped, tag = 'scoped memory for tpu_custom_call.1']
    #allocation5 [shape = 'u8[8192]{0}', space=vmem, size = 0x2000, scoped, tag = 'output window, operand 0, single buffered']
    %7 = vsyncpa [#allocation3], 0
    %8 = vsyncpa [#allocation4], 0
    // Predicated region
    $region2: #{tpu_custom_call.1} parent=1 // pred_check
      _
    $region3: #{tpu_custom_call.1} parent=1 // pred_check_branch
      %10 = sbr.rel (0) target = $region5
    $region4: #{tpu_custom_call.1} parent=1 // pred_region
      _
    $region5: #{tpu_custom_call.1} parent=1 // pred_fallthru
      _
    // Predicated region
    $region6: #{tpu_custom_call.1} parent=1 // pred_check
      _
    $region7: #{tpu_custom_call.1} parent=1 // pred_check_branch
      %12 = sbr.rel (0) target = $region9
    $region8: #{tpu_custom_call.1} parent=1 // pred_region
      %14 = vsyncadd [#allocation3], 0
      %s15 = sshll.u32 %s1, 4
      %s16 = int_to_ptr.hbm [resolvable:$true] %s15
      %s17 = sshll.u32 [#allocation2], 4
      %s18 = int_to_ptr.vmem [resolvable:$true] %s17
      %23 = dma.hbm_to_vmem [thread:$0]  %s16, 2048, %s18, [#allocation3], 128, 128, 8
    $region9: #{tpu_custom_call.1} parent=1 // pred_fallthru
      _
    // Predicated region
    $region10: #{tpu_custom_call.1} parent=1 // pred_check
      _
    $region11: #{tpu_custom_call.1} parent=1 // pred_check_branch
      %25 = sbr.rel (0) target = $region13
    $region12: #{tpu_custom_call.1} parent=1 // pred_region
      %27 = dma.done [#allocation3], 2048
    $region13: #{tpu_custom_call.1} parent=1 // pred_fallthru
      _
    %v28 = vld [vmem:[%s0] sm:$0xff]
    %v29 = vld [vmem:[%s0 + $0x8] sm:$0xff]
    %v30 = vlaneseq
    %v31 = vand.u32 %v30, 127
    %32 = vset.pattern.permute.xlu0 0
    %33 = vperm.xlu0 %32, %v28
    %v34 = vpop.permute.xlu0 %33
    %35 = vset.pattern.permute.xlu0 0
    %36 = vperm.xlu0 %35, %v29
    %v37 = vpop.permute.xlu0 %36
    %vm38 = vcmp.eq.s32.totalorder %v31, %v34
    %vm39 = vcmp.eq.s32.totalorder %v31, %v37
    %v40 = vsel %vm38, 1, 0
    %v41 = vsel %vm39, 1, 0
    %v42 = vcvt.s32.f32 %v40
    %v43 = vcvt.s32.f32 %v41
    %v44 = vld [vmem:[#allocation2] sm:$0xff]
    %v45 = vld [vmem:[#allocation2 + $0x8] sm:$0xff]
    %v46 = vld [vmem:[#allocation2 + $0x10] sm:$0xff]
    %v47 = vld [vmem:[#allocation2 + $0x18] sm:$0xff]
    %v48 = vld [vmem:[#allocation2 + $0x20] sm:$0xff]
    %v49 = vld [vmem:[#allocation2 + $0x28] sm:$0xff]
    %v50 = vld [vmem:[#allocation2 + $0x30] sm:$0xff]
    %v51 = vld [vmem:[#allocation2 + $0x38] sm:$0xff]
    %v52 = vld [vmem:[#allocation2 + $0x40] sm:$0xff]
    %v53 = vld [vmem:[#allocation2 + $0x48] sm:$0xff]
    %v54 = vld [vmem:[#allocation2 + $0x50] sm:$0xff]
    %v55 = vld [vmem:[#allocation2 + $0x58] sm:$0xff]
    %v56 = vld [vmem:[#allocation2 + $0x60] sm:$0xff]
    %v57 = vld [vmem:[#allocation2 + $0x68] sm:$0xff]
    %v58 = vld [vmem:[#allocation2 + $0x70] sm:$0xff]
    %v59 = vld [vmem:[#allocation2 + $0x78] sm:$0xff]
    %60 = vmatpush.msra.mxu0 %v59
    %61 = vmatpush.msra.mxu0 %v58
    %62 = vmatpush.msra.mxu0 %v57
    %63 = vmatpush.msra.mxu0 %v56
    %64 = vmatpush.msra.mxu0 %v55
    %65 = vmatpush.msra.mxu0 %v54
    %66 = vmatpush.msra.mxu0 %v53
    %67 = vmatpush.msra.mxu0 %v52
    %68 = vmatpush.msra.mxu0 %v51
    %69 = vmatpush.msra.mxu0 %v50
    %70 = vmatpush.msra.mxu0 %v49
    %71 = vmatpush.msra.mxu0 %v48
    %72 = vmatpush.msra.mxu0 %v47
    %73 = vmatpush.msra.mxu0 %v46
    %74 = vmatpush.msra.mxu0 %v45
    %75 = vmatpush.msra.mxu0 %v44
    %76 = vmatmul.f32.gmra.mxu0 %v42
    %v77 = vpop.f32.mrf.mxu0
    %v78 = vadd.f32 0.0, %v77
    %79 = vmatmul.f32.gmra.mxu0 %v43
    %v80 = vpop.f32.mrf.mxu0
    %v81 = vadd.f32 0.0, %v80
    %82 = vdwg.mxu0
    %83 = vst [vmem:[#allocation5] sm:$0xff] %v78
    %84 = vst [vmem:[#allocation5 + $0x8] sm:$0xff] %v81
    // Predicated region
    $region14: #{tpu_custom_call.1} parent=1 // pred_check
      _
    $region15: #{tpu_custom_call.1} parent=1 // pred_check_branch
      %86 = sbr.rel (0) target = $region17
    $region16: #{tpu_custom_call.1} parent=1 // pred_region
      %88 = vsyncadd [#allocation4], 0
      %s89 = sshll.u32 [#allocation5], 4
      %s90 = int_to_ptr.vmem [resolvable:$true] %s89
      %s91 = sshll.u32 %s2, 4
      %s92 = int_to_ptr.hbm [resolvable:$true] %s91
      %97 = dma.vmem_to_hbm [thread:$0]  %s90, 256, %s92, [#allocation4], 128, 128, 8
    $region17: #{tpu_custom_call.1} parent=1 // pred_fallthru
      _
    // Predicated region
    $region18: #{tpu_custom_call.1} parent=1 // pred_check
      _
    $region19: #{tpu_custom_call.1} parent=1 // pred_check_branch
      %99 = sbr.rel (0) target = $region21
    $region20: #{tpu_custom_call.1} parent=1 // pred_region
      %101 = dma.done [#allocation4], 256
    $region21: #{tpu_custom_call.1} parent=1 // pred_fallthru
      _
    %102 = vsyncpa [#allocation3], 1
    %103 = vsyncpa [#allocation4], 1

</llo_original>
